<compile_context>
chip_gen: v5e
topology: v5e:2x2
jax: 0.10.0
libtpu: 0.0.40
codegen_flags: <defaults>
</compile_context>

<pallas_src>
import functools

import jax
import jax.numpy as jnp
from jax import lax
from jax.experimental import pallas as pl
from jax.experimental.pallas import tpu as pltpu

_NEG_BIG = -1e30  # finite "minus infinity": avoids inf-inf NaNs in online LSE


def _cdiv(a, b):
    return (a + b - 1) // b


def _round_up(x, m):
    return ((x + m - 1) // m) * m


def _vmem_capacity_bytes():
    """Per-core VMEM capacity; conservative fallback if the query fails."""
    try:
        cap = int(getattr(pltpu.get_tpu_info(), "vmem_capacity_bytes", 0))
        if cap > 0:
            return cap
    except Exception:
        pass
    return 64 << 20  # v7x per-TC size: safe lower bound everywhere


def _choose_tiles(n, c, d, logits_itemsize, vmem_cap, *,
                  max_tile_n=1024, min_row_tiles=4):
    """Pick (tile_n, tile_c) from the actual per-core VMEM capacity."""
    row_mult = 16 if logits_itemsize < 4 else 8
    big_vmem = vmem_cap >= (100 << 20)            # v5e/v6e: 128 MiB, v7x: 64 MiB
    max_single_c_tile = 8192 if big_vmem else 4096
    class_tile = 4096 if big_vmem else 2048
    block_budget = vmem_cap // 3

    # Small/medium class counts: one full-width class tile (block dim == array
    # dim).  Large class counts: tile classes (multiple of 128) + online LSE.
    tile_c = c if c <= max_single_c_tile else class_tile

    # Approx bytes streamed per row: double-buffered logits + logvar + columns.
    per_row = 2 * tile_c * logits_itemsize + 2 * d * 4 + 4 * 128 * 4
    rows = block_budget // max(per_row, 1)
    rows = max(row_mult, min(rows, max_tile_n, _round_up(n, row_mult)))
    # Keep >= min_row_tiles row tiles when possible so the "parallel" row axis
    # can be sharded across v7x's two TensorCores (no-op on v5e/v6e).
    rows_cap = max(row_mult, _round_up(_cdiv(n, min_row_tiles), row_mult))
    rows = min(rows, rows_cap)
    rows = max(row_mult, (rows // row_mult) * row_mult)
    return rows, tile_c


# ---------------------------------------------------------------------------
# Fused kernel: class-tiled online log-sum-exp CE (+ focal / weight) + KL
# ---------------------------------------------------------------------------
def _cls_loss_kernel(*refs, mode, power, use_weight, use_kl, single_tile,
                     n_real, c_real, need_row_mask, need_class_mask):
    idx = 0
    logits_ref = refs[idx]; idx += 1
    target_ref = refs[idx]; idx += 1
    weight_ref = None
    if use_weight:
        weight_ref = refs[idx]; idx += 1
    logvar_ref = None
    if use_kl:
        logvar_ref = refs[idx]; idx += 1
    out_ref = refs[idx]; idx += 1
    if single_tile:
        m_sc = l_sc = t_sc = None
    else:
        m_sc, l_sc, t_sc = refs[idx], refs[idx + 1], refs[idx + 2]

    i = pl.program_id(0)          # batch/row tile  -> "parallel"
    j = pl.program_id(1)          # class tile      -> "arbitrary" (reduction)
    nj = pl.num_programs(1)

    tn, tc = logits_ref.shape
    tgt = target_ref[...]                                       # (tn, 1) int32

    def tile_stats(apply_class_mask):
        """Per-row (max, sum-exp, target-logit) for the current class tile."""
        logits = logits_ref[...].astype(jnp.float32)            # (tn, tc)
        cls_ids = j * tc + lax.broadcasted_iota(jnp.int32, (tn, tc), 1)
        hit = cls_ids == tgt                  # target mask (before class mask)
        if apply_class_mask:
            # Only OOB-padded columns (class ids >= c_real) are rewritten.
            logits = jnp.where(cls_ids < c_real, logits, jnp.float32(_NEG_BIG))
        mx = jnp.max(logits, axis=-1, keepdims=True)
        se = jnp.sum(jnp.exp(logits - mx), axis=-1, keepdims=True)
        th = jnp.sum(jnp.where(hit, logits, 0.0), axis=-1, keepdims=True)
        return mx, se, th

    def epilogue(m_fin, l_fin, t_fin):
        ce = m_fin + jnp.log(l_fin) - t_fin                     # (tn, 1)

        if mode == 'focal_loss':
            prob = jnp.exp(-ce)
            base = jnp.maximum(1.0 - prob, 0.0)   # clamp: rounding can go <0
            p = float(power)
            if p.is_integer() and 0 <= int(p) <= 8:
                wpow = jnp.ones_like(base)
                for _ in range(int(p)):
                    wpow = wpow * base
            else:
                wpow = base ** jnp.float32(p)
            per_sample = wpow * ce
        else:
            per_sample = ce
            if use_weight:
                per_sample = per_sample * weight_ref[...].astype(jnp.float32)

        valid = None
        if need_row_mask:
            # OOB rows of the last block hold garbage -> select, never multiply.
            row_ids = i * tn + lax.broadcasted_iota(jnp.int32, (tn, 1), 0)
            valid = row_ids < n_real
            per_sample = jnp.where(valid, per_sample, 0.0)
        ce_partial = jnp.sum(per_sample)

        # lane-dense partial-sum block: lane 0 = CE partial, lane 1 = KL partial
        sub = lax.broadcasted_iota(jnp.int32, (1, 8, 128), 1)
        lane = lax.broadcasted_iota(jnp.int32, (1, 8, 128), 2)
        first_row = sub == 0
        vals = jnp.where(first_row & (lane == 0), ce_partial, 0.0)

        if use_kl:
            lv = logvar_ref[...].astype(jnp.float32)            # (tn, D)
            # NOTE: mirrors the PyTorch reference, which ignores mu in the KL.
            kl = -(1.0 + lv - jnp.exp(lv)) * 0.5
            if valid is not None:
                kl = jnp.where(valid, kl, 0.0)
            kl_partial = jnp.sum(kl)
            vals = jnp.where(first_row & (lane == 1), kl_partial, vals)

        out_ref[...] = vals.astype(jnp.float32)

    if single_tile:
        # --- fast path: one class tile -> no scratch, no online LSE ---------
        mx, se, th = tile_stats(need_class_mask)
        epilogue(mx, se, th)
        return

    @pl.when(j == 0)
    def _():
        m_sc[...] = jnp.full(m_sc.shape, _NEG_BIG, m_sc.dtype)
        l_sc[...] = jnp.zeros(l_sc.shape, l_sc.dtype)
        t_sc[...] = jnp.zeros(t_sc.shape, t_sc.dtype)

    def update(apply_class_mask):
        mx, se, th = tile_stats(apply_class_mask)
        m_prev = m_sc[...]
        m_new = jnp.maximum(m_prev, mx)
        l_sc[...] = (l_sc[...] * jnp.exp(m_prev - m_new)
                     + se * jnp.exp(mx - m_new))
        m_sc[...] = m_new
        t_sc[...] = t_sc[...] + th

    if need_class_mask:
        # Pay the class-boundary mask only on the last (possibly partial) tile.
        @pl.when(j < nj - 1)
        def _():
            update(False)

        @pl.when(j == nj - 1)
        def _():
            update(True)
    else:
        update(False)

    @pl.when(j == nj - 1)
    def _():
        epilogue(m_sc[...], l_sc[...], t_sc[...])


# ---------------------------------------------------------------------------
# Wrapper (mirrors ClsLoss.forward)
# ---------------------------------------------------------------------------
def cls_loss(predy, target, weight=None, mu=None, logvar=None, *,
             loss_mode='softmax', loss_power=2.0, kl_lambda=0.01,
             tile_n=None, tile_c=None, logits_buffers=2):
    if loss_mode == 'hardmining':
        # TODO(synk): hardmining branch in the reference uses undefined names
        # (label/batch_size/ind_sorted/pred); not reproduced here.
        raise NotImplementedError("hardmining mode not implemented")

    n, c = predy.shape
    use_kl = (mu is not None) and (logvar is not None)
    use_weight = (loss_mode != 'focal_loss') and (weight is not None)
    d = logvar.shape[1] if use_kl else 0
    if use_kl:
        assert logvar.shape[0] == n, "logvar batch must match predy batch"

    itemsize = jnp.dtype(predy.dtype).itemsize
    row_mult = 16 if itemsize < 4 else 8
    vmem_cap = _vmem_capacity_bytes()

    auto_tn, auto_tc = _choose_tiles(n, c, d, itemsize, vmem_cap)
    tn = int(tile_n) if tile_n is not None else auto_tn
    tc = int(tile_c) if tile_c is not None else auto_tc
    # Keep user-supplied tiles (8,128)-legal.
    tn = _round_up(max(tn, 1), row_mult)
    if tc != c:
        tc = _round_up(max(tc, 1), 128)

    num_row_tiles = _cdiv(n, tn)
    num_cls_tiles = _cdiv(c, tc)
    need_row_mask = num_row_tiles * tn != n
    need_class_mask = num_cls_tiles * tc != c
    single_tile = num_cls_tiles == 1

    # No host-side padding of the logits (or anything else): the last partial
    # blocks are read out-of-bounds (garbage) and discarded in-kernel.
    target2d = target.astype(jnp.int32).reshape(n, 1)

    logits_spec = pl.BlockSpec((tn, tc), lambda i, j: (i, j))
    if logits_buffers is not None and int(logits_buffers) > 2:
        # Optional deeper pipelining (worth sweeping on v5e/v6e if VMEM allows).
        logits_spec = pl.BlockSpec((tn, tc), lambda i, j: (i, j),
                                   pipeline_mode=pl.Buffered(int(logits_buffers)))

    inputs = [predy, target2d]
    in_specs = [
        logits_spec,
        pl.BlockSpec((tn, 1), lambda i, j: (i, 0)),   # DMA'd once per row tile
    ]
    if use_weight:
        inputs.append(weight.astype(jnp.float32).reshape(n, 1))
        in_specs.append(pl.BlockSpec((tn, 1), lambda i, j: (i, 0)))
    if use_kl:
        inputs.append(logvar)
        in_specs.append(pl.BlockSpec((tn, d), lambda i, j: (i, 0)))

    scratch_shapes = ([] if single_tile
                      else [pltpu.VMEM((tn, 1), jnp.float32)] * 3)

    kernel = functools.partial(
        _cls_loss_kernel, mode=loss_mode, power=loss_power,
        use_weight=use_weight, use_kl=use_kl, single_tile=single_tile,
        n_real=n, c_real=c,
        need_row_mask=need_row_mask, need_class_mask=need_class_mask)

    vmem_limit = int(min(vmem_cap * 0.6, 96 * 1024 * 1024))

    partials = pl.pallas_call(
        kernel,
        out_shape=jax.ShapeDtypeStruct((num_row_tiles, 8, 128), jnp.float32),
        grid_spec=pltpu.PrefetchScalarGridSpec(
            num_scalar_prefetch=0,
            grid=(num_row_tiles, num_cls_tiles),
            in_specs=in_specs,
            out_specs=pl.BlockSpec((1, 8, 128), lambda i, j: (i, 0, 0)),
            scratch_shapes=scratch_shapes,
        ),
        compiler_params=pltpu.CompilerParams(
            dimension_semantics=("parallel", "arbitrary"),
            vmem_limit_bytes=vmem_limit),
    )(*inputs)

    loss = jnp.sum(partials[:, 0, 0]) / jnp.float32(n)
    if use_kl:
        loss = loss + kl_lambda * (jnp.sum(partials[:, 0, 1]) / jnp.float32(n))
    return loss


# ---------------------------------------------------------------------------
# Reference (plain JAX) for verification
# ---------------------------------------------------------------------------
def _ref_loss(predy, target, weight, mu, logvar, *, loss_mode, loss_power,
              kl_lambda):
    logp_all = jax.nn.log_softmax(predy.astype(jnp.float32), axis=-1)
    ce = -logp_all[jnp.arange(predy.shape[0]), target]
    if loss_mode == 'focal_loss':
        prob = jnp.exp(-ce)
        loss = jnp.mean((1.0 - prob) ** loss_power * ce)
    else:
        if weight is not None:
            ce = ce * weight
        loss = jnp.mean(ce)
    if mu is not None and logvar is not None:
        kl = -(1.0 + logvar - jnp.exp(logvar)) / 2.0
        loss = loss + kl_lambda * jnp.mean(jnp.sum(kl, axis=1))
    return loss


# ---------------------------------------------------------------------------
if __name__ == "__main__":
    key = jax.random.PRNGKey(0)
    ks = jax.random.split(key, 12)

    # --- case 1: 'softmax' branch with per-sample weight + KL (fast path) ---
    N, C, D = 16, 32, 32
    predy = jax.random.normal(ks[0], (N, C), jnp.float32)
    target = jax.random.randint(ks[1], (N,), 0, C, jnp.int32)
    weight = jax.random.uniform(ks[2], (N,), jnp.float32, 0.5, 1.5)
    mu = 0.1 * jax.random.normal(ks[3], (N, D), jnp.float32)
    logvar = 0.1 * jax.random.normal(ks[4], (N, D), jnp.float32)

    out = cls_loss(predy, target, weight=weight, mu=mu, logvar=logvar,
                   loss_mode='softmax', kl_lambda=0.01)
    jax.block_until_ready(out)
    ref = _ref_loss(predy, target, weight, mu, logvar,
                    loss_mode='softmax', loss_power=2.0, kl_lambda=0.01)
    assert jnp.allclose(out, ref, rtol=1e-4, atol=1e-5), (out, ref)

    # --- case 2: focal-loss branch, integer power (no weight, no KL) --------
    out_f = cls_loss(predy, target, loss_mode='focal_loss', loss_power=2.0)
    jax.block_until_ready(out_f)
    ref_f = _ref_loss(predy, target, None, None, None,
                      loss_mode='focal_loss', loss_power=2.0, kl_lambda=0.01)
    assert jnp.allclose(out_f, ref_f, rtol=1e-4, atol=1e-5), (out_f, ref_f)

    # --- case 3: class-tiled online-LSE + unpadded (OOB) last row/class blocks
    N3, C3, D3 = 24, 320, 32
    predy3 = jax.random.normal(ks[5], (N3, C3), jnp.float32)
    target3 = jax.random.randint(ks[6], (N3,), 0, C3, jnp.int32)
    weight3 = jax.random.uniform(ks[7], (N3,), jnp.float32, 0.5, 1.5)
    logvar3 = 0.1 * jax.random.normal(ks[8], (N3, D3), jnp.float32)
    mu3 = jnp.zeros((N3, D3), jnp.float32)

    out3 = cls_loss(predy3, target3, weight=weight3, mu=mu3, logvar=logvar3,
                    loss_mode='softmax', kl_lambda=0.01, tile_n=16, tile_c=128)
    jax.block_until_ready(out3)
    ref3 = _ref_loss(predy3, target3, weight3, mu3, logvar3,
                     loss_mode='softmax', loss_power=2.0, kl_lambda=0.01)
    assert jnp.allclose(out3, ref3, rtol=1e-4, atol=1e-5), (out3, ref3)

    # --- case 4: focal loss, fractional power + partial (OOB) last row tile -
    N4, C4 = 20, 32
    predy4 = jax.random.normal(ks[9], (N4, C4), jnp.float32)
    target4 = jax.random.randint(ks[10], (N4,), 0, C4, jnp.int32)
    out4 = cls_loss(predy4, target4, loss_mode='focal_loss', loss_power=2.5,
                    tile_n=8)
    jax.block_until_ready(out4)
    ref4 = _ref_loss(predy4, target4, None, None, None,
                     loss_mode='focal_loss', loss_power=2.5, kl_lambda=0.01)
    assert jnp.allclose(out4, ref4, rtol=1e-4, atol=1e-5), (out4, ref4)

    print("KERNEL_OK")
</pallas_src>

<mosaic_0001>
module attributes {stable_mosaic.version = 11 : i64} {
  func.func @_cls_loss_kernel(%arg0: i32, %arg1: i32, %arg2: memref<8x32xf32, #tpu.memory_space<vmem>>, %arg3: memref<8x1xi32, #tpu.memory_space<vmem>>, %arg4: memref<8x1xf32, #tpu.memory_space<vmem>>, %arg5: memref<8x32xf32, #tpu.memory_space<vmem>>, %arg6: memref<1x8x128xf32, #tpu.memory_space<vmem>>) attributes {dimension_semantics = [#tpu.dimension_semantics<parallel>, #tpu.dimension_semantics<arbitrary>], iteration_bounds = array<i64: 2, 1>, scalar_prefetch = 0 : i64, scratch_operands = 0 : i64, tpu.core_type = #tpu.core_type<tc>, window_params = [{transform_indices = @transform_0, window_bounds = array<i64: 8, 32>}, {transform_indices = @transform_1, window_bounds = array<i64: 8, 1>}, {transform_indices = @transform_2, window_bounds = array<i64: 8, 1>}, {transform_indices = @transform_3, window_bounds = array<i64: 8, 32>}, {transform_indices = @transform_4, window_bounds = array<i64: 1, 8, 128>}]} {
    %c0 = arith.constant 0 : index
    %c0_0 = arith.constant 0 : index
    %0 = vector.load %arg3[%c0, %c0_0] : memref<8x1xi32, #tpu.memory_space<vmem>>, vector<8x1xi32>
    %c0_1 = arith.constant 0 : index
    %c0_2 = arith.constant 0 : index
    %1 = vector.load %arg2[%c0_1, %c0_2] : memref<8x32xf32, #tpu.memory_space<vmem>>, vector<8x32xf32>
    %c32_i32 = arith.constant 32 : i32
    %2 = arith.muli %arg1, %c32_i32 : i32
    %3 = tpu.iota {dimensions = array<i32: 1>} : vector<8x32xi32>
    %4 = vector.broadcast %2 : i32 to vector<8x32xi32>
    %5 = arith.addi %4, %3 : vector<8x32xi32>
    %6 = vector.broadcast %0 : vector<8x1xi32> to vector<8x32xi32>
    %7 = arith.cmpi eq, %5, %6 : vector<8x32xi32>
    %cst = arith.constant dense<0xFF800000> : vector<8xf32>
    %8 = vector.multi_reduction <maximumf>, %1, %cst [1] : vector<8x32xf32> to vector<8xf32>
    %9 = vector.shape_cast %8 : vector<8xf32> to vector<8x1xf32>
    %10 = vector.broadcast %9 : vector<8x1xf32> to vector<8x32xf32>
    %11 = arith.subf %1, %10 : vector<8x32xf32>
    %12 = math.exp %11 : vector<8x32xf32>
    %cst_3 = arith.constant dense<0.000000e+00> : vector<8xf32>
    %13 = vector.multi_reduction <add>, %12, %cst_3 [1] : vector<8x32xf32> to vector<8xf32>
    %14 = vector.shape_cast %13 : vector<8xf32> to vector<8x1xf32>
    %cst_4 = arith.constant 0.000000e+00 : f32
    %15 = vector.broadcast %cst_4 : f32 to vector<8x32xf32>
    %16 = arith.select %7, %1, %15 : vector<8x32xi1>, vector<8x32xf32>
    %cst_5 = arith.constant dense<0.000000e+00> : vector<8xf32>
    %17 = vector.multi_reduction <add>, %16, %cst_5 [1] : vector<8x32xf32> to vector<8xf32>
    %18 = vector.shape_cast %17 : vector<8xf32> to vector<8x1xf32>
    %19 = math.log %14 : vector<8x1xf32>
    %20 = arith.addf %9, %19 : vector<8x1xf32>
    %21 = arith.subf %20, %18 : vector<8x1xf32>
    %c0_6 = arith.constant 0 : index
    %c0_7 = arith.constant 0 : index
    %22 = vector.load %arg4[%c0_6, %c0_7] : memref<8x1xf32, #tpu.memory_space<vmem>>, vector<8x1xf32>
    %23 = arith.mulf %21, %22 : vector<8x1xf32>
    %24 = vector.shape_cast %23 : vector<8x1xf32> to vector<1x8x1xf32>
    %cst_8 = arith.constant dense<0.000000e+00> : vector<1xf32>
    %25 = vector.multi_reduction <add>, %24, %cst_8 [1, 2] : vector<1x8x1xf32> to vector<1xf32>
    %26 = vector.shape_cast %25 : vector<1xf32> to vector<1x1x1xf32>
    %27 = vector.extract %26[0, 0, 0] : f32 from vector<1x1x1xf32>
    %28 = tpu.iota {dimensions = array<i32: 1>} : vector<1x8x128xi32>
    %29 = tpu.iota {dimensions = array<i32: 2>} : vector<1x8x128xi32>
    %c0_i32 = arith.constant 0 : i32
    %30 = vector.broadcast %c0_i32 : i32 to vector<1x8x128xi32>
    %31 = arith.cmpi eq, %28, %30 : vector<1x8x128xi32>
    %c0_i32_9 = arith.constant 0 : i32
    %32 = vector.broadcast %c0_i32_9 : i32 to vector<1x8x128xi32>
    %33 = arith.cmpi eq, %29, %32 : vector<1x8x128xi32>
    %34 = arith.andi %31, %33 : vector<1x8x128xi1>
    %cst_10 = arith.constant 0.000000e+00 : f32
    %35 = vector.broadcast %27 : f32 to vector<1x8x128xf32>
    %36 = vector.broadcast %cst_10 : f32 to vector<1x8x128xf32>
    %37 = arith.select %34, %35, %36 : vector<1x8x128xi1>, vector<1x8x128xf32>
    %c0_11 = arith.constant 0 : index
    %c0_12 = arith.constant 0 : index
    %38 = vector.load %arg5[%c0_11, %c0_12] : memref<8x32xf32, #tpu.memory_space<vmem>>, vector<8x32xf32>
    %cst_13 = arith.constant 1.000000e+00 : f32
    %39 = vector.broadcast %cst_13 : f32 to vector<8x32xf32>
    %40 = arith.addf %39, %38 : vector<8x32xf32>
    %41 = math.exp %38 : vector<8x32xf32>
    %42 = arith.subf %40, %41 : vector<8x32xf32>
    %cst_14 = arith.constant 0.000000e+00 : f32
    %43 = vector.broadcast %cst_14 : f32 to vector<8x32xf32>
    %44 = arith.subf %43, %42 : vector<8x32xf32>
    %cst_15 = arith.constant 5.000000e-01 : f32
    %45 = vector.broadcast %cst_15 : f32 to vector<8x32xf32>
    %46 = arith.mulf %44, %45 : vector<8x32xf32>
    %47 = vector.shape_cast %46 : vector<8x32xf32> to vector<1x8x32xf32>
    %cst_16 = arith.constant dense<0.000000e+00> : vector<1xf32>
    %48 = vector.multi_reduction <add>, %47, %cst_16 [1, 2] : vector<1x8x32xf32> to vector<1xf32>
    %49 = vector.shape_cast %48 : vector<1xf32> to vector<1x1x1xf32>
    %50 = vector.extract %49[0, 0, 0] : f32 from vector<1x1x1xf32>
    %c1_i32 = arith.constant 1 : i32
    %51 = vector.broadcast %c1_i32 : i32 to vector<1x8x128xi32>
    %52 = arith.cmpi eq, %29, %51 : vector<1x8x128xi32>
    %53 = arith.andi %31, %52 : vector<1x8x128xi1>
    %54 = vector.broadcast %50 : f32 to vector<1x8x128xf32>
    %55 = arith.select %53, %54, %37 : vector<1x8x128xi1>, vector<1x8x128xf32>
    %c0_17 = arith.constant 0 : index
    %c0_18 = arith.constant 0 : index
    %c0_19 = arith.constant 0 : index
    %56 = vector.load %arg6[%c0_17, %c0_18, %c0_19] : memref<1x8x128xf32, #tpu.memory_space<vmem>>, vector<1x8x128xf32>
    tpu.vector_store %arg6[%c0_17, %c0_18, %c0_19], %55 {strides = array<i32>} : memref<1x8x128xf32, #tpu.memory_space<vmem>>, vector<1x8x128xf32>,
    return
  }
  func.func @transform_0(%arg0: i32, %arg1: i32) -> (i32, i32) {
    %c0_i32 = arith.constant 0 : i32
    return %arg0, %arg1 : i32, i32
  }
  func.func @transform_1(%arg0: i32, %arg1: i32) -> (i32, i32) {
    %c0_i32 = arith.constant 0 : i32
    %c0_i32_0 = arith.constant 0 : i32
    return %arg0, %c0_i32 : i32, i32
  }
  func.func @transform_2(%arg0: i32, %arg1: i32) -> (i32, i32) {
    %c0_i32 = arith.constant 0 : i32
    %c0_i32_0 = arith.constant 0 : i32
    return %arg0, %c0_i32 : i32, i32
  }
  func.func @transform_3(%arg0: i32, %arg1: i32) -> (i32, i32) {
    %c0_i32 = arith.constant 0 : i32
    %c0_i32_0 = arith.constant 0 : i32
    return %arg0, %c0_i32 : i32, i32
  }
  func.func @transform_4(%arg0: i32, %arg1: i32) -> (i32, i32, i32) {
    %c0_i32 = arith.constant 0 : i32
    %c0_i32_0 = arith.constant 0 : i32
    %c0_i32_1 = arith.constant 0 : i32
    return %arg0, %c0_i32, %c0_i32_0 : i32, i32, i32
  }
}

</mosaic_0001>

<llo_original>
// kernel: tpu_custom_call.1
$region0: #{tpu_custom_call.1}
  #allocation0 [shape = 'u32[]', space=smem, size = 0x4, offset = 0x4, fixed_abs, tag = 'smem constant byte address 0x4 - core index']
  #allocation1 [shape = 'u32[72,128]{1,0:T(1,128)}', space=vmem, size = 0x9000, scoped, tag = 'internal scratch']
  %s0 = inlined_call_operand.vmem [shape: f32[16,32], index: 0, kind: input, shape index: {}]
  %s1 = inlined_call_operand.vmem [shape: s32[16,1], index: 1, kind: input, shape index: {}]
  %s2 = inlined_call_operand.vmem [shape: f32[16,1], index: 2, kind: input, shape index: {}]
  %s3 = inlined_call_operand.vmem [shape: f32[16,32], index: 3, kind: input, shape index: {}]
  %s4 = inlined_call_operand.hbm [shape: f32[2,8,128], index: 4, kind: output, shape index: {}]
  %s5 = sld [smem:[#allocation0]]
  $region49: #{tpu_custom_call.1} parent=0
    _
  %s7 = ssub.s32 1, %s5
  %s8 = scalar_select 0, %s7, %s5
  $region1: #{tpu_custom_call.1} parent=0
    #allocation2 [shape = 'u8[8192]{0}', space=vmem, size = 0x2000, scoped, tag = 'output window, operand 0']
    #allocation3 [shape = 's32[2]{0}', space=sflag, size = 0x8, scoped, tag = 'scoped memory for tpu_custom_call.1']
    %9 = vsyncpa [#allocation3], 0
    %s10 = scalar_lea.sflag [#allocation3], 1
    %11 = vsyncpa %s10, 0
    loop: start=0, step=1, limit=4
    $region2: #{tpu_custom_call.1} parent=1 // loop_pre_header
      _
    $region3: #{tpu_custom_call.1} parent=1 // loop_header
      %s13 = sphi 0, %s17
      %p14 = scmp.ge.s32.totalorder %s13, 4
      %s20 = sphi 0, %s32
      %s21 = sphi 0, %s28
      %s22 = sphi 0, %s20
      %s23 = sphi 0, %s21
      %s24 = sphi 0, %s22
      %s25 = sphi 0, %s23
      %s37 = sphi 0, %s39
      %s40 = sphi 0, %s37
      %s41 = sphi 0, %s40
      %s57 = sphi 0, %s41
      %s63 = sphi 0, %s65
      %s66 = sphi 0, %s63
      %s67 = sphi 0, %s66
      %s83 = sphi 0, %s67
      %s89 = sphi 0, %s91
      %s92 = sphi 0, %s89
      %s93 = sphi 0, %s92
      %s109 = sphi 0, %s93
      %s115 = sphi 0, %s117
      %s118 = sphi 0, %s115
      %s119 = sphi 0, %s118
      %s135 = sphi 0, %s119
      %s141 = sphi 0, %s143
      %s144 = sphi 0, %s141
      %s145 = sphi 0, %s144
      %s161 = sphi 0, %s145
    $region4: #{tpu_custom_call.1} parent=1 // loop_header_branch
      %16 = sbr.rel (%p14) target = $region8
    $region5: #{tpu_custom_call.1} parent=1 // loop_body
      %s18 = ssub.s32 %s13, 1
      %s19 = ssub.s32 %s13, 2
      %s26 = sadd.s32 1, %s21
      %p27 = scmp.ge.s32.totalorder %s26, 1
      %s28 = scalar_select %p27, 0, %s26
      %s29 = sadd.s32 1, %s20
      %s30 = scalar_select %p27, %s29, %s20
      %p31 = scmp.ge.s32.totalorder %s30, 2
      %s32 = scalar_select %p31, 0, %s30
      %s33 = ssub.s32 %s20, %s32
      %s34 = ssub.s32 %s21, %s28
      %s35 = sor.u32 %s33, %s34
      %p36 = scmp.eq.s32.totalorder %s35, 0
      %s38 = sadd.s32 %s37, 1
      %s39 = scalar_select %p36, %s37, %s38
      %p42 = pneg %p36
      %p43 = scmp.eq.s32.totalorder %s13, 1
      %p44 = por %p42, %p43
      %p45 = scmp.ne.s32.totalorder %s37, %s40
      %p46 = scmp.eq.s32.totalorder %s13, 0
      %p47 = por %p45, %p46
      %p48 = scmp.ne.s32.totalorder %s37, %s40
      %p49 = scmp.eq.s32.totalorder %s18, 1
      %p50 = por %p48, %p49
      %p51 = scmp.ne.s32.totalorder %s40, %s41
      %p52 = scmp.eq.s32.totalorder %s18, 0
      %p53 = por %p51, %p52
      %p54 = scmp.ne.s32.totalorder %s40, %s41
      %p55 = scmp.eq.s32.totalorder %s19, 1
      %p56 = por %p54, %p55
      %p58 = scmp.ne.s32.totalorder %s41, %s57
      %p59 = scmp.eq.s32.totalorder %s19, 0
      %p60 = por %p58, %p59
      %s61 = ssub.s32 %s20, %s32
      %p62 = scmp.eq.s32.totalorder %s61, 0
      %s64 = sadd.s32 %s63, 1
      %s65 = scalar_select %p62, %s63, %s64
      %p68 = pneg %p62
      %p69 = scmp.eq.s32.totalorder %s13, 1
      %p70 = por %p68, %p69
      %p71 = scmp.ne.s32.totalorder %s63, %s66
      %p72 = scmp.eq.s32.totalorder %s13, 0
      %p73 = por %p71, %p72
      %p74 = scmp.ne.s32.totalorder %s63, %s66
      %p75 = scmp.eq.s32.totalorder %s18, 1
      %p76 = por %p74, %p75
      %p77 = scmp.ne.s32.totalorder %s66, %s67
      %p78 = scmp.eq.s32.totalorder %s18, 0
      %p79 = por %p77, %p78
      %p80 = scmp.ne.s32.totalorder %s66, %s67
      %p81 = scmp.eq.s32.totalorder %s19, 1
      %p82 = por %p80, %p81
      %p84 = scmp.ne.s32.totalorder %s67, %s83
      %p85 = scmp.eq.s32.totalorder %s19, 0
      %p86 = por %p84, %p85
      %s87 = ssub.s32 %s20, %s32
      %p88 = scmp.eq.s32.totalorder %s87, 0
      %s90 = sadd.s32 %s89, 1
      %s91 = scalar_select %p88, %s89, %s90
      %p94 = pneg %p88
      %p95 = scmp.eq.s32.totalorder %s13, 1
      %p96 = por %p94, %p95
      %p97 = scmp.ne.s32.totalorder %s89, %s92
      %p98 = scmp.eq.s32.totalorder %s13, 0
      %p99 = por %p97, %p98
      %p100 = scmp.ne.s32.totalorder %s89, %s92
      %p101 = scmp.eq.s32.totalorder %s18, 1
      %p102 = por %p100, %p101
      %p103 = scmp.ne.s32.totalorder %s92, %s93
      %p104 = scmp.eq.s32.totalorder %s18, 0
      %p105 = por %p103, %p104
      %p106 = scmp.ne.s32.totalorder %s92, %s93
      %p107 = scmp.eq.s32.totalorder %s19, 1
      %p108 = por %p106, %p107
      %p110 = scmp.ne.s32.totalorder %s93, %s109
      %p111 = scmp.eq.s32.totalorder %s19, 0
      %p112 = por %p110, %p111
      %s113 = ssub.s32 %s20, %s32
      %p114 = scmp.eq.s32.totalorder %s113, 0
      %s116 = sadd.s32 %s115, 1
      %s117 = scalar_select %p114, %s115, %s116
      %p120 = pneg %p114
      %p121 = scmp.eq.s32.totalorder %s13, 1
      %p122 = por %p120, %p121
      %p123 = scmp.ne.s32.totalorder %s115, %s118
      %p124 = scmp.eq.s32.totalorder %s13, 0
      %p125 = por %p123, %p124
      %p126 = scmp.ne.s32.totalorder %s115, %s118
      %p127 = scmp.eq.s32.totalorder %s18, 1
      %p128 = por %p126, %p127
      %p129 = scmp.ne.s32.totalorder %s118, %s119
      %p130 = scmp.eq.s32.totalorder %s18, 0
      %p131 = por %p129, %p130
      %p132 = scmp.ne.s32.totalorder %s118, %s119
      %p133 = scmp.eq.s32.totalorder %s19, 1
      %p134 = por %p132, %p133
      %p136 = scmp.ne.s32.totalorder %s119, %s135
      %p137 = scmp.eq.s32.totalorder %s19, 0
      %p138 = por %p136, %p137
      %s139 = ssub.s32 %s20, %s32
      %p140 = scmp.eq.s32.totalorder %s139, 0
      %s142 = sadd.s32 %s141, 1
      %s143 = scalar_select %p140, %s141, %s142
      %p146 = pneg %p140
      %p147 = scmp.eq.s32.totalorder %s13, 1
      %p148 = por %p146, %p147
      %p149 = scmp.ne.s32.totalorder %s141, %s144
      %p150 = scmp.eq.s32.totalorder %s13, 0
      %p151 = por %p149, %p150
      %p152 = scmp.ne.s32.totalorder %s141, %s144
      %p153 = scmp.eq.s32.totalorder %s18, 1
      %p154 = por %p152, %p153
      %p155 = scmp.ne.s32.totalorder %s144, %s145
      %p156 = scmp.eq.s32.totalorder %s18, 0
      %p157 = por %p155, %p156
      %p158 = scmp.ne.s32.totalorder %s144, %s145
      %p159 = scmp.eq.s32.totalorder %s19, 1
      %p160 = por %p158, %p159
      %p162 = scmp.ne.s32.totalorder %s145, %s161
      %p163 = scmp.eq.s32.totalorder %s19, 0
      %p164 = por %p162, %p163
      %p165 = scmp.le.s32.totalorder 1, %s13
      %p166 = scmp.lt.s32.totalorder %s13, 3
      %p167 = pnand %p165, %p166
      %p168 = pneg %p167
      // Predicated region
      $region9: #{tpu_custom_call.1} parent=5 // pred_check
        _
      $region10: #{tpu_custom_call.1} parent=5 // pred_check_branch
        %170 = sbr.rel (%p167) target = $region12
      $region11: #{tpu_custom_call.1} parent=5 // pred_region
        %s171 = ssub.s32 %s13, 1
      $region12: #{tpu_custom_call.1} parent=5 // pred_fallthru
        _
      %p172 = scmp.lt.s32.totalorder %s13, 2
      // Predicated region
      $region13: #{tpu_custom_call.1} parent=5 // pred_check
        %p173 = pneg %p172
      $region14: #{tpu_custom_call.1} parent=5 // pred_check_branch
        %175 = sbr.rel (%p173) target = $region16
      $region15: #{tpu_custom_call.1} parent=5 // pred_region
        // Predicated region
        $region17: #{tpu_custom_call.1} parent=15 // pred_check
          %p176 = pneg %p47
        $region18: #{tpu_custom_call.1} parent=15 // pred_check_branch
          %178 = sbr.rel (%p176) target = $region20
        $region19: #{tpu_custom_call.1} parent=15 // pred_region
          %p179 = scmp.lt.s32.totalorder %s20, 1
          %s180 = scalar_select %p179, %s20, 1
          %p181 = scmp.lt.s32.totalorder %s21, 0
          %s182 = scalar_select %p181, %s21, 0
          %s183 = sadd.s32 %s182, %s180
          %s184 = smul.addr %s183, 8
          %s185 = scalar_lea.vmem %s0, %s184
        $region20: #{tpu_custom_call.1} parent=15 // pred_fallthru
          _
        // Predicated region
        $region21: #{tpu_custom_call.1} parent=15 // pred_check
          %p186 = pneg %p73
        $region22: #{tpu_custom_call.1} parent=15 // pred_check_branch
          %188 = sbr.rel (%p186) target = $region24
        $region23: #{tpu_custom_call.1} parent=15 // pred_region
          %p189 = scmp.lt.s32.totalorder %s20, 1
          %s190 = scalar_select %p189, %s20, 1
          %s191 = smul.addr %s190, 8
          %s192 = scalar_lea.vmem %s1, %s191
        $region24: #{tpu_custom_call.1} parent=15 // pred_fallthru
          _
        // Predicated region
        $region25: #{tpu_custom_call.1} parent=15 // pred_check
          %p193 = pneg %p99
        $region26: #{tpu_custom_call.1} parent=15 // pred_check_branch
          %195 = sbr.rel (%p193) target = $region28
        $region27: #{tpu_custom_call.1} parent=15 // pred_region
          %p196 = scmp.lt.s32.totalorder %s20, 1
          %s197 = scalar_select %p196, %s20, 1
          %s198 = smul.addr %s197, 8
          %s199 = scalar_lea.vmem %s2, %s198
        $region28: #{tpu_custom_call.1} parent=15 // pred_fallthru
          _
        // Predicated region
        $region29: #{tpu_custom_call.1} parent=15 // pred_check
          %p200 = pneg %p125
        $region30: #{tpu_custom_call.1} parent=15 // pred_check_branch
          %202 = sbr.rel (%p200) target = $region32
        $region31: #{tpu_custom_call.1} parent=15 // pred_region
          %p203 = scmp.lt.s32.totalorder %s20, 1
          %s204 = scalar_select %p203, %s20, 1
          %s205 = smul.addr %s204, 8
          %s206 = scalar_lea.vmem %s3, %s205
        $region32: #{tpu_custom_call.1} parent=15 // pred_fallthru
          _
      $region16: #{tpu_custom_call.1} parent=5 // pred_fallthru
        _
      %p207 = scmp.le.s32.totalorder 1, %s13
      %p208 = scmp.lt.s32.totalorder %s13, 3
      %p209 = pnand %p207, %p208
      %p210 = pneg %p209
      // Predicated region
      $region33: #{tpu_custom_call.1} parent=5 // pred_check
        _
      $region34: #{tpu_custom_call.1} parent=5 // pred_check_branch
        %212 = sbr.rel (%p209) target = $region36
      $region35: #{tpu_custom_call.1} parent=5 // pred_region
        %s213 = ssub.s32 %s13, 1
        %p214 = scmp.lt.s32.totalorder %s22, 1
        %s215 = scalar_select %p214, %s22, 1
        %p216 = scmp.lt.s32.totalorder %s23, 0
        %s217 = scalar_select %p216, %s23, 0
        %s218 = sadd.s32 %s217, %s215
        %s219 = smul.addr %s218, 8
        %s220 = scalar_lea.vmem %s0, %s219
        %p221 = pneg %p53
        %p222 = pneg %p50
        %p223 = scmp.lt.s32.totalorder %s22, 1
        %s224 = scalar_select %p223, %s22, 1
        %s225 = smul.addr %s224, 8
        %s226 = scalar_lea.vmem %s1, %s225
        %p227 = pneg %p79
        %p228 = pneg %p76
        %p229 = scmp.lt.s32.totalorder %s22, 1
        %s230 = scalar_select %p229, %s22, 1
        %s231 = smul.addr %s230, 8
        %s232 = scalar_lea.vmem %s2, %s231
        %p233 = pneg %p105
        %p234 = pneg %p102
        %p235 = scmp.lt.s32.totalorder %s22, 1
        %s236 = scalar_select %p235, %s22, 1
        %s237 = smul.addr %s236, 8
        %s238 = scalar_lea.vmem %s3, %s237
        %p239 = pneg %p131
        %p240 = pneg %p128
        %p241 = pneg %p157
        %p242 = pneg %p154
        %s243 = sand.u32 %s144, 1
        %s244 = scalar_lea.sflag [#allocation3], %s243
        %s245 = sand.u32 %s144, 1
        %s246 = smul.addr %s245, 8
        %s247 = scalar_lea.vmem [#allocation2], %s246
        %p248 = scmp.lt.s32.totalorder %s22, 1
        %s249 = scalar_select %p248, %s22, 1
        %p250 = scmp.lt.s32.totalorder %s23, 0
        %s251 = scalar_select %p250, %s23, 0
        %s252 = sadd.s32 %s251, %s249
        %s253 = smul.addr %s252, 8
        %s254 = scalar_lea.vmem %s0, %s253
        %p255 = scmp.lt.s32.totalorder %s22, 1
        %s256 = scalar_select %p255, %s22, 1
        %s257 = smul.addr %s256, 8
        %s258 = scalar_lea.vmem %s1, %s257
        %p259 = scmp.lt.s32.totalorder %s22, 1
        %s260 = scalar_select %p259, %s22, 1
        %s261 = smul.addr %s260, 8
        %s262 = scalar_lea.vmem %s2, %s261
        %p263 = scmp.lt.s32.totalorder %s22, 1
        %s264 = scalar_select %p263, %s22, 1
        %s265 = smul.addr %s264, 8
        %s266 = scalar_lea.vmem %s3, %s265
        %v267 = vld [vmem:[%s258] sm:$0xff]
        %v268 = vld [vmem:[%s254] sm:$0xff]
        %s269 = smul.u32 %s23, 32
        %v270 = vlaneseq
        %v271 = vand.u32 %v270, 127
        %v272 = vstv %s269
        %v273 = vadd.s32 %v272, %v271
        %274 = vset.pattern.permute.xlu0 0
        %275 = vperm.xlu0 %274, %v267
        %v276 = vpop.permute.xlu0 %275
        %vm277 = vcmp.eq.s32.totalorder %v273, %v276
        %vm278 = vcmask 261120
        %v279 = vsel %vm278, %v268, -inf
        %280 = vmax.xlane.f32.xlu0 %v279
        %v281 = vpop.xlane.xlu0 %280
        %v282 = vsub.f32 %v268, %v281
        %v283 = vmul.f32 %v282, 1.442695
        %v284 = vpow.pop %v283
        %v285 = vsel %vm278, %v284, 0.0
        %286 = vadd.xlane.f32.xlu0 %v285
        %v287 = vpop.xlane.xlu0 %286
        %v288 = vsel %vm277, %v268, 0.0
        %v289 = vsel %vm278, %v288, 0.0
        %290 = vadd.xlane.f32.xlu0 %v289
        %v291 = vpop.xlane.xlu0 %290
        %v292 = vlog2.pop %v287
        %v293 = vmul.f32 %v292, 0.6931472
        %v294 = vadd.f32 %v281, %v293
        %v295 = vsub.f32 %v294, %v291
        %v296 = vld [vmem:[%s262] sm:$0xff]
        %v297 = vmul.f32 %v295, %v296
        %vm298 = vcmask 7168
        %v299 = vsel %vm298, %v297, 0.0
        %300 = vadd.xlane.f32.xlu0 %v299
        %v301 = vpop.xlane.xlu0 %300
        %v302 = vrot.slane %v301, 4
        %v303 = vadd.f32 %v301, %v302
        %v304 = vrot.slane %v303, 2
        %v305 = vadd.f32 %v303, %v304
        %v306 = vrot.slane %v305, 1
        %v307 = vadd.f32 %v305, %v306
        %s308 = vtos %v307
        %v309 = vlaneseq
        %v310 = vshrl.u32 %v309, 7
        %vm311 = vcmp.eq.s32.totalorder %v310, 0
        %vm312 = vcmp.eq.s32.totalorder %v271, 0
        %vm313 = vmand %vm311, %vm312
        %v314 = vstv %s308
        %v315 = vsel %vm313, %v314, 0.0
        %v316 = vld [vmem:[%s266] sm:$0xff]
        %v317 = vadd.f32 %v316, 1.0
        %v318 = vmul.f32 %v316, 1.442695
        %v319 = vpow.pop %v318
        %v320 = vsub.f32 %v317, %v319
        %v321 = vsub.f32 0.0, %v320
        %v322 = vmul.f32 %v321, 0.5
        %v323 = vsel %vm278, %v322, 0.0
        %324 = vadd.xlane.f32.xlu0 %v323
        %v325 = vpop.xlane.xlu0 %324
        %v326 = vrot.slane %v325, 4
        %v327 = vadd.f32 %v325, %v326
        %v328 = vrot.slane %v327, 2
        %v329 = vadd.f32 %v327, %v328
        %v330 = vrot.slane %v329, 1
        %v331 = vadd.f32 %v329, %v330
        %s332 = vtos %v331
        %vm333 = vcmp.eq.s32.totalorder %v271, 1
        %vm334 = vmand %vm311, %vm333
        %v335 = vstv %s332
        %v336 = vsel %vm334, %v335, %v315
        %337 = vst [vmem:[%s247] sm:$0xff] %v336
        %s338 = sand.u32 %s144, 1
        %s339 = scalar_lea.sflag [#allocation3], %s338
        %s340 = sand.u32 %s144, 1
        %s341 = smul.addr %s340, 8
        %s342 = scalar_lea.vmem [#allocation2], %s341
        // Predicated region
        $region37: #{tpu_custom_call.1} parent=35 // pred_check
          %p343 = pneg %p154
        $region38: #{tpu_custom_call.1} parent=35 // pred_check_branch
          %345 = sbr.rel (%p343) target = $region40
        $region39: #{tpu_custom_call.1} parent=35 // pred_region
          %347 = vsyncadd %s339, 0
          %s348 = smul.addr %s22, 8
          %s349 = scalar_lea.hbm %s4, %s348
          %s351 = sshll.u32 %s342, 4
          %s352 = int_to_ptr.vmem [resolvable:$true] %s351
          %s353 = sshll.u32 %s349, 4
          %s354 = int_to_ptr.hbm [resolvable:$true] %s353
          %356 = dma.vmem_to_hbm [thread:$0]  %s352, 128, %s354, %s339
        $region40: #{tpu_custom_call.1} parent=35 // pred_fallthru
          _
      $region36: #{tpu_custom_call.1} parent=5 // pred_fallthru
        _
      %p357 = scmp.le.s32.totalorder 2, %s13
      // Predicated region
      $region41: #{tpu_custom_call.1} parent=5 // pred_check
        %p358 = pneg %p357
      $region42: #{tpu_custom_call.1} parent=5 // pred_check_branch
        %360 = sbr.rel (%p358) target = $region44
      $region43: #{tpu_custom_call.1} parent=5 // pred_region
        %s361 = ssub.s32 %s13, 2
        // Predicated region
        $region45: #{tpu_custom_call.1} parent=43 // pred_check
          %p362 = pneg %p160
        $region46: #{tpu_custom_call.1} parent=43 // pred_check_branch
          %364 = sbr.rel (%p362) target = $region48
        $region47: #{tpu_custom_call.1} parent=43 // pred_region
          %s365 = sand.u32 %s145, 1
          %s366 = scalar_lea.sflag [#allocation3], %s365
          %s367 = sand.u32 %s145, 1
          %s368 = smul.addr %s367, 8
          %s369 = scalar_lea.vmem [#allocation2], %s368
          %371 = dma.done %s366, 128
        $region48: #{tpu_custom_call.1} parent=43 // pred_fallthru
          _
      $region44: #{tpu_custom_call.1} parent=5 // pred_fallthru
        _
    $region6: #{tpu_custom_call.1} parent=1 // loop_footer
      %s17 = sadd.s32 1, %s13
    $region7: #{tpu_custom_call.1} parent=1 // loop_footer_branch
      %12 = sbr.rel target = $region3
    $region8: #{tpu_custom_call.1} parent=1 // loop_exit
      _
    %372 = vsyncpa [#allocation3], 1
    %s373 = scalar_lea.sflag [#allocation3], 1
    %374 = vsyncpa %s373, 1

</llo_original>
